<compile_context>
chip_gen: v7x
topology: tpu7x:2x2x1
jax: 0.10.0
libtpu: 0.0.40
codegen_flags: <defaults>
</compile_context>

<pallas_src>
import functools

import jax
import jax.numpy as jnp
from jax.experimental import pallas as pl
from jax.experimental.pallas import tpu as pltpu

_OUT_PAD = 128  # lane-dense output width


def _ffn_kernel(x_ref, w1_ref, b1_ref, w2_ref, b2_ref, w3_ref, b3_ref, o_ref):
    # x/weights are bf16; every matmul accumulates in f32 on the MXU.
    x = x_ref[...]
    h1 = jnp.dot(x, w1_ref[...], preferred_element_type=jnp.float32) + b1_ref[...]
    h1 = jnp.maximum(h1, 0.0)
    h2 = jnp.dot(h1.astype(jnp.bfloat16), w2_ref[...],
                 preferred_element_type=jnp.float32) + b2_ref[...]
    h2 = jnp.maximum(h2, 0.0)
    out = jnp.dot(h2.astype(jnp.bfloat16), w3_ref[...],
                  preferred_element_type=jnp.float32) + b3_ref[...]
    o_ref[...] = out.astype(o_ref.dtype)


def _round_up(x, m):
    return ((x + m - 1) // m) * m


@functools.partial(jax.jit, static_argnames=("block_b",))
def ffn_mnist_forward(x_nchw, params, block_b=1024):
    """x_nchw: (B, C, H, W) float32. Returns (B, dim_out) float32."""
    w1, b1, w2, b2, w3, b3 = params
    B = x_nchw.shape[0]
    dim_in = w1.shape[0]
    dim_out = w3.shape[1]

    # Flatten exactly like xb.view(xb.size(0), -1); cast streamed input to bf16.
    x_flat = x_nchw.reshape(B, -1).astype(jnp.bfloat16)

    # Batch tile: multiple of 8 (sublane), capped at block_b; pad B to a multiple of it.
    tm = min(block_b, _round_up(B, 8))
    b_pad = _round_up(B, tm)
    if b_pad != B:
        x_flat = jnp.pad(x_flat, ((0, b_pad - B), (0, 0)))
    grid_b = pl.cdiv(b_pad, tm)

    # bf16 weights; last layer padded to 128 lanes (zeros) for lane-dense stores.
    w1b = w1.astype(jnp.bfloat16)
    w2b = w2.astype(jnp.bfloat16)
    w3p = jnp.zeros((w3.shape[0], _OUT_PAD), jnp.bfloat16).at[:, :dim_out].set(
        w3.astype(jnp.bfloat16))
    b3p = jnp.zeros((1, _OUT_PAD), jnp.float32).at[:, :dim_out].set(b3)

    resident = lambda shape: pl.BlockSpec(shape, lambda i: (0, 0))

    out = pl.pallas_call(
        _ffn_kernel,
        out_shape=jax.ShapeDtypeStruct((b_pad, _OUT_PAD), jnp.float32),
        grid_spec=pl.GridSpec(
            grid=(grid_b,),
            in_specs=[
                pl.BlockSpec((tm, dim_in), lambda i: (i, 0)),  # streamed x tiles
                resident(w1b.shape), resident(b1.shape),
                resident(w2b.shape), resident(b2.shape),
                resident(w3p.shape), resident(b3p.shape),
            ],
            out_specs=pl.BlockSpec((tm, _OUT_PAD), lambda i: (i, 0)),
        ),
        compiler_params=pltpu.CompilerParams(
            dimension_semantics=("parallel",),  # shard batch tiles across TCs (v7x)
        ),
    )(x_flat, w1b, b1, w2b, b2, w3p, b3p)

    return out[:B, :dim_out]


def init_params(key, dim_in, dim_out):
    """Deterministic init mimicking PyTorch nn.Linear default (U[-1/sqrt(fan_in), ...])."""
    dims = [(dim_in, 16), (16, 32), (32, dim_out)]
    params = []
    for (fi, fo) in dims:
        key, kw, kb = jax.random.split(key, 3)
        bound = 1.0 / jnp.sqrt(fi)
        w = jax.random.uniform(kw, (fi, fo), jnp.float32, -bound, bound)
        b = jax.random.uniform(kb, (1, fo), jnp.float32, -bound, bound)
        params += [w, b]
    return tuple(params)


def _reference(x_nchw, params):
    """Pure-JAX reference with the same bf16 input/weight casting as the kernel."""
    w1, b1, w2, b2, w3, b3 = params
    xf = x_nchw.reshape(x_nchw.shape[0], -1).astype(jnp.bfloat16)
    h1 = jnp.maximum(
        jnp.dot(xf, w1.astype(jnp.bfloat16), preferred_element_type=jnp.float32) + b1, 0.0)
    h2 = jnp.maximum(
        jnp.dot(h1.astype(jnp.bfloat16), w2.astype(jnp.bfloat16),
                preferred_element_type=jnp.float32) + b2, 0.0)
    return jnp.dot(h2.astype(jnp.bfloat16), w3.astype(jnp.bfloat16),
                   preferred_element_type=jnp.float32) + b3


if __name__ == "__main__":
    key = jax.random.PRNGKey(0)
    B, C, H, W = 2, 1, 16, 16          # small MNIST-like input
    dim_in = C * H * W                  # 256
    dim_out = 10

    key, kx = jax.random.split(key)
    x = jax.random.normal(kx, (B, C, H, W), jnp.float32)
    params = init_params(key, dim_in, dim_out)

    # Single-tile path (B=2 -> one padded 8-row tile).
    out = jax.block_until_ready(ffn_mnist_forward(x, params))
    assert out.shape == (B, dim_out)
    ref = _reference(x, params)
    assert jnp.allclose(out, ref, atol=2e-3, rtol=2e-3)
    # Also stay reasonably close to the pure-f32 reference.
    xf = x.reshape(B, -1)
    ref_f32 = jnp.maximum(xf @ params[0] + params[1], 0.0)
    ref_f32 = jnp.maximum(ref_f32 @ params[2] + params[3], 0.0)
    ref_f32 = ref_f32 @ params[4] + params[5]
    assert jnp.allclose(out, ref_f32, atol=5e-2, rtol=5e-2)

    # Multi-tile path (exercises the batch grid, resident weights, and padding).
    key, kx2 = jax.random.split(key)
    x2 = jax.random.normal(kx2, (200, C, H, W), jnp.float32)
    out2 = jax.block_until_ready(ffn_mnist_forward(x2, params, block_b=64))
    ref2 = _reference(x2, params)
    assert out2.shape == (200, dim_out)
    assert jnp.allclose(out2, ref2, atol=2e-3, rtol=2e-3)

    print("KERNEL_OK")
</pallas_src>

<mosaic_0001>
module attributes {stable_mosaic.version = 11 : i64} {
  func.func @_ffn_kernel(%arg0: i32, %arg1: memref<8x256xbf16, #tpu.memory_space<vmem>>, %arg2: memref<256x16xbf16, #tpu.memory_space<vmem>>, %arg3: memref<1x16xf32, #tpu.memory_space<vmem>>, %arg4: memref<16x32xbf16, #tpu.memory_space<vmem>>, %arg5: memref<1x32xf32, #tpu.memory_space<vmem>>, %arg6: memref<32x128xbf16, #tpu.memory_space<vmem>>, %arg7: memref<1x128xf32, #tpu.memory_space<vmem>>, %arg8: memref<8x128xf32, #tpu.memory_space<vmem>>) attributes {dimension_semantics = [#tpu.dimension_semantics<parallel>], iteration_bounds = array<i64: 1>, scalar_prefetch = 0 : i64, scratch_operands = 0 : i64, tpu.core_type = #tpu.core_type<tc>, window_params = [{transform_indices = @transform_0, window_bounds = array<i64: 8, 256>}, {pipeline_mode = #tpu.pipeline_mode<synchronous>, transform_indices = @transform_1, window_bounds = array<i64: 256, 16>}, {pipeline_mode = #tpu.pipeline_mode<synchronous>, transform_indices = @transform_2, window_bounds = array<i64: 1, 16>}, {pipeline_mode = #tpu.pipeline_mode<synchronous>, transform_indices = @transform_3, window_bounds = array<i64: 16, 32>}, {pipeline_mode = #tpu.pipeline_mode<synchronous>, transform_indices = @transform_4, window_bounds = array<i64: 1, 32>}, {pipeline_mode = #tpu.pipeline_mode<synchronous>, transform_indices = @transform_5, window_bounds = array<i64: 32, 128>}, {pipeline_mode = #tpu.pipeline_mode<synchronous>, transform_indices = @transform_6, window_bounds = array<i64: 1, 128>}, {transform_indices = @transform_7, window_bounds = array<i64: 8, 128>}]} {
    %c0 = arith.constant 0 : index
    %c0_0 = arith.constant 0 : index
    %0 = vector.load %arg1[%c0, %c0_0] : memref<8x256xbf16, #tpu.memory_space<vmem>>, vector<8x256xbf16>
    %c0_1 = arith.constant 0 : index
    %c0_2 = arith.constant 0 : index
    %1 = vector.load %arg2[%c0_1, %c0_2] : memref<256x16xbf16, #tpu.memory_space<vmem>>, vector<256x16xbf16>
    %cst = arith.constant dense<0.000000e+00> : vector<8x16xf32>
    %2 = tpu.matmul %0, %1, %cst {dimension_numbers = #tpu.dot_dimension_numbers<[1], [0], [0], [1], [0, 0, 1, 1], [], []>} : vector<8x256xbf16>, vector<256x16xbf16>, vector<8x16xf32> -> vector<8x16xf32>
    %c0_3 = arith.constant 0 : index
    %c0_4 = arith.constant 0 : index
    %3 = vector.load %arg3[%c0_3, %c0_4] : memref<1x16xf32, #tpu.memory_space<vmem>>, vector<1x16xf32>
    %4 = vector.broadcast %3 : vector<1x16xf32> to vector<8x16xf32>
    %5 = arith.addf %2, %4 : vector<8x16xf32>
    %cst_5 = arith.constant 0.000000e+00 : f32
    %6 = vector.broadcast %cst_5 : f32 to vector<8x16xf32>
    %7 = arith.maximumf %5, %6 : vector<8x16xf32>
    %8 = arith.truncf %7 : vector<8x16xf32> to vector<8x16xbf16>
    %c0_6 = arith.constant 0 : index
    %c0_7 = arith.constant 0 : index
    %9 = vector.load %arg4[%c0_6, %c0_7] : memref<16x32xbf16, #tpu.memory_space<vmem>>, vector<16x32xbf16>
    %cst_8 = arith.constant dense<0.000000e+00> : vector<8x32xf32>
    %10 = tpu.matmul %8, %9, %cst_8 {dimension_numbers = #tpu.dot_dimension_numbers<[1], [0], [0], [1], [0, 0, 1, 1], [], []>} : vector<8x16xbf16>, vector<16x32xbf16>, vector<8x32xf32> -> vector<8x32xf32>
    %c0_9 = arith.constant 0 : index
    %c0_10 = arith.constant 0 : index
    %11 = vector.load %arg5[%c0_9, %c0_10] : memref<1x32xf32, #tpu.memory_space<vmem>>, vector<1x32xf32>
    %12 = vector.broadcast %11 : vector<1x32xf32> to vector<8x32xf32>
    %13 = arith.addf %10, %12 : vector<8x32xf32>
    %cst_11 = arith.constant 0.000000e+00 : f32
    %14 = vector.broadcast %cst_11 : f32 to vector<8x32xf32>
    %15 = arith.maximumf %13, %14 : vector<8x32xf32>
    %16 = arith.truncf %15 : vector<8x32xf32> to vector<8x32xbf16>
    %c0_12 = arith.constant 0 : index
    %c0_13 = arith.constant 0 : index
    %17 = vector.load %arg6[%c0_12, %c0_13] : memref<32x128xbf16, #tpu.memory_space<vmem>>, vector<32x128xbf16>
    %cst_14 = arith.constant dense<0.000000e+00> : vector<8x128xf32>
    %18 = tpu.matmul %16, %17, %cst_14 {dimension_numbers = #tpu.dot_dimension_numbers<[1], [0], [0], [1], [0, 0, 1, 1], [], []>} : vector<8x32xbf16>, vector<32x128xbf16>, vector<8x128xf32> -> vector<8x128xf32>
    %c0_15 = arith.constant 0 : index
    %c0_16 = arith.constant 0 : index
    %19 = vector.load %arg7[%c0_15, %c0_16] : memref<1x128xf32, #tpu.memory_space<vmem>>, vector<1x128xf32>
    %20 = vector.broadcast %19 : vector<1x128xf32> to vector<8x128xf32>
    %21 = arith.addf %18, %20 : vector<8x128xf32>
    %c0_17 = arith.constant 0 : index
    %c0_18 = arith.constant 0 : index
    %22 = vector.load %arg8[%c0_17, %c0_18] : memref<8x128xf32, #tpu.memory_space<vmem>>, vector<8x128xf32>
    tpu.vector_store %arg8[%c0_17, %c0_18], %21 {strides = array<i32>} : memref<8x128xf32, #tpu.memory_space<vmem>>, vector<8x128xf32>,
    return
  }
  func.func @transform_0(%arg0: i32) -> (i32, i32) {
    %c0_i32 = arith.constant 0 : i32
    %c0_i32_0 = arith.constant 0 : i32
    return %arg0, %c0_i32 : i32, i32
  }
  func.func @transform_1(%arg0: i32) -> (i32, i32) {
    %c0_i32 = arith.constant 0 : i32
    %c0_i32_0 = arith.constant 0 : i32
    %c0_i32_1 = arith.constant 0 : i32
    return %c0_i32, %c0_i32_0 : i32, i32
  }
  func.func @transform_2(%arg0: i32) -> (i32, i32) {
    %c0_i32 = arith.constant 0 : i32
    %c0_i32_0 = arith.constant 0 : i32
    %c0_i32_1 = arith.constant 0 : i32
    return %c0_i32, %c0_i32_0 : i32, i32
  }
  func.func @transform_3(%arg0: i32) -> (i32, i32) {
    %c0_i32 = arith.constant 0 : i32
    %c0_i32_0 = arith.constant 0 : i32
    %c0_i32_1 = arith.constant 0 : i32
    return %c0_i32, %c0_i32_0 : i32, i32
  }
  func.func @transform_4(%arg0: i32) -> (i32, i32) {
    %c0_i32 = arith.constant 0 : i32
    %c0_i32_0 = arith.constant 0 : i32
    %c0_i32_1 = arith.constant 0 : i32
    return %c0_i32, %c0_i32_0 : i32, i32
  }
  func.func @transform_5(%arg0: i32) -> (i32, i32) {
    %c0_i32 = arith.constant 0 : i32
    %c0_i32_0 = arith.constant 0 : i32
    %c0_i32_1 = arith.constant 0 : i32
    return %c0_i32, %c0_i32_0 : i32, i32
  }
  func.func @transform_6(%arg0: i32) -> (i32, i32) {
    %c0_i32 = arith.constant 0 : i32
    %c0_i32_0 = arith.constant 0 : i32
    %c0_i32_1 = arith.constant 0 : i32
    return %c0_i32, %c0_i32_0 : i32, i32
  }
  func.func @transform_7(%arg0: i32) -> (i32, i32) {
    %c0_i32 = arith.constant 0 : i32
    %c0_i32_0 = arith.constant 0 : i32
    return %arg0, %c0_i32 : i32, i32
  }
}

</mosaic_0001>

<llo_original>
// kernel: ffn_mnist_forward.1
$region0: #{ffn_mnist_forward.1}
  #allocation0 [shape = 'u32[]', space=smem, size = 0x4, offset = 0x4, fixed_abs, tag = 'smem constant byte address 0x4 - core index']
  #allocation1 [shape = 'u32[144,128]{1,0:T(1,128)}', space=vmem, size = 0x12000, scoped, tag = 'internal scratch']
  %s0 = inlined_call_operand.vmem [shape: bf16[8,256], index: 0, kind: input, shape index: {}]
  %s1 = inlined_call_operand.vmem [shape: bf16[256,16], index: 1, kind: input, shape index: {}]
  %s2 = inlined_call_operand.vmem [shape: f32[1,16], index: 2, kind: input, shape index: {}]
  %s3 = inlined_call_operand.vmem [shape: bf16[16,32], index: 3, kind: input, shape index: {}]
  %s4 = inlined_call_operand.vmem [shape: f32[1,32], index: 4, kind: input, shape index: {}]
  %s5 = inlined_call_operand.vmem [shape: bf16[32,128], index: 5, kind: input, shape index: {}]
  %s6 = inlined_call_operand.vmem [shape: f32[1,128], index: 6, kind: input, shape index: {}]
  %s7 = inlined_call_operand.vmem [shape: f32[8,128], index: 7, kind: output, shape index: {}]
  %s8 = sld [smem:[#allocation0]]
  $region38: #{ffn_mnist_forward.1} parent=0
    _
  %s10 = ssub.s32 1, %s8
  %s11 = scalar_select 0, %s10, %s8
  // Predicated region
  $region2: #{ffn_mnist_forward.1} parent=0 // pred_check
    _
  $region3: #{ffn_mnist_forward.1} parent=0 // pred_check_branch
    %13 = sbr.rel (0) target = $region5
  $region4: #{ffn_mnist_forward.1} parent=0 // pred_region
    _
  $region5: #{ffn_mnist_forward.1} parent=0 // pred_fallthru
    _
  // Predicated region
  $region6: #{ffn_mnist_forward.1} parent=0 // pred_check
    _
  $region7: #{ffn_mnist_forward.1} parent=0 // pred_check_branch
    %15 = sbr.rel (0) target = $region9
  $region8: #{ffn_mnist_forward.1} parent=0 // pred_region
    _
  $region9: #{ffn_mnist_forward.1} parent=0 // pred_fallthru
    _
  // Predicated region
  $region10: #{ffn_mnist_forward.1} parent=0 // pred_check
    _
  $region11: #{ffn_mnist_forward.1} parent=0 // pred_check_branch
    %17 = sbr.rel (0) target = $region13
  $region12: #{ffn_mnist_forward.1} parent=0 // pred_region
    _
  $region13: #{ffn_mnist_forward.1} parent=0 // pred_fallthru
    _
  // Predicated region
  $region14: #{ffn_mnist_forward.1} parent=0 // pred_check
    _
  $region15: #{ffn_mnist_forward.1} parent=0 // pred_check_branch
    %19 = sbr.rel (0) target = $region17
  $region16: #{ffn_mnist_forward.1} parent=0 // pred_region
    _
  $region17: #{ffn_mnist_forward.1} parent=0 // pred_fallthru
    _
  // Predicated region
  $region18: #{ffn_mnist_forward.1} parent=0 // pred_check
    _
  $region19: #{ffn_mnist_forward.1} parent=0 // pred_check_branch
    %21 = sbr.rel (0) target = $region21
  $region20: #{ffn_mnist_forward.1} parent=0 // pred_region
    _
  $region21: #{ffn_mnist_forward.1} parent=0 // pred_fallthru
    _
  // Predicated region
  $region22: #{ffn_mnist_forward.1} parent=0 // pred_check
    _
  $region23: #{ffn_mnist_forward.1} parent=0 // pred_check_branch
    %23 = sbr.rel (0) target = $region25
  $region24: #{ffn_mnist_forward.1} parent=0 // pred_region
    _
  $region25: #{ffn_mnist_forward.1} parent=0 // pred_fallthru
    _
  // Predicated region
  $region26: #{ffn_mnist_forward.1} parent=0 // pred_check
    _
  $region27: #{ffn_mnist_forward.1} parent=0 // pred_check_branch
    %25 = sbr.rel (0) target = $region29
  $region28: #{ffn_mnist_forward.1} parent=0 // pred_region
    _
  $region29: #{ffn_mnist_forward.1} parent=0 // pred_fallthru
    _
  %v27 = vld [vmem:[%s0] sm:$0xff]
  %v28 = vld [vmem:[%s1] sm:$0xf]
  %v29 = vld [vmem:[%s1 + $0x4] sm:$0xf]
  %v30 = vld [vmem:[%s1 + $0x8] sm:$0xf]
  %v31 = vld [vmem:[%s1 + $0xc] sm:$0xf]
  %v32 = vld [vmem:[%s1 + $0x10] sm:$0xf]
  %v33 = vld [vmem:[%s1 + $0x14] sm:$0xf]
  %v34 = vld [vmem:[%s1 + $0x18] sm:$0xf]
  %v35 = vld [vmem:[%s1 + $0x1c] sm:$0xf]
  %v36 = vld [vmem:[%s1 + $0x20] sm:$0xf]
  %v37 = vld [vmem:[%s1 + $0x24] sm:$0xf]
  %v38 = vld [vmem:[%s1 + $0x28] sm:$0xf]
  %v39 = vld [vmem:[%s1 + $0x2c] sm:$0xf]
  %v40 = vld [vmem:[%s1 + $0x30] sm:$0xf]
  %v41 = vld [vmem:[%s1 + $0x34] sm:$0xf]
  %v42 = vld [vmem:[%s1 + $0x38] sm:$0xf]
  %v43 = vld [vmem:[%s1 + $0x3c] sm:$0xf]
  %v44 = vld [vmem:[%s1 + $0x40] sm:$0xf]
  %v45 = vld [vmem:[%s1 + $0x44] sm:$0xf]
  %v46 = vld [vmem:[%s1 + $0x48] sm:$0xf]
  %v47 = vld [vmem:[%s1 + $0x4c] sm:$0xf]
  %v48 = vld [vmem:[%s1 + $0x50] sm:$0xf]
  %v49 = vld [vmem:[%s1 + $0x54] sm:$0xf]
  %v50 = vld [vmem:[%s1 + $0x58] sm:$0xf]
  %v51 = vld [vmem:[%s1 + $0x5c] sm:$0xf]
  %v52 = vld [vmem:[%s1 + $0x60] sm:$0xf]
  %v53 = vld [vmem:[%s1 + $0x64] sm:$0xf]
  %v54 = vld [vmem:[%s1 + $0x68] sm:$0xf]
  %v55 = vld [vmem:[%s1 + $0x6c] sm:$0xf]
  %v56 = vld [vmem:[%s1 + $0x70] sm:$0xf]
  %v57 = vld [vmem:[%s1 + $0x74] sm:$0xf]
  %v58 = vld [vmem:[%s1 + $0x78] sm:$0xf]
  %v59 = vld [vmem:[%s1 + $0x7c] sm:$0xf]
  %v60 = vld [vmem:[%s2] sm:$0x1]
  %v62 = vlaneseq
  %v63 = vshrl.u32 %v62, 7
  %v64 = vsub.s32 0, %v63
  %v65 = vrot.slane %v60, %v64
  %v68 = vunpack.c.l.b16 %v27
  %v69 = vunpack.c.h.b16 %v27
  %v70 = vpack.c.b16 %v68, %v68
  %v71 = vpack.c.b16 %v69, %v69
  %v106 = vunpack.c.l.b16 %v28
  %v107 = vunpack.c.l.b16 %v29
  %v108 = vunpack.c.l.b16 %v30
  %v109 = vunpack.c.l.b16 %v31
  %v110 = vunpack.c.l.b16 %v32
  %v111 = vunpack.c.l.b16 %v33
  %v112 = vunpack.c.l.b16 %v34
  %v113 = vunpack.c.l.b16 %v35
  %v114 = vunpack.c.l.b16 %v36
  %v115 = vunpack.c.l.b16 %v37
  %v116 = vunpack.c.l.b16 %v38
  %v117 = vunpack.c.l.b16 %v39
  %v118 = vunpack.c.l.b16 %v40
  %v119 = vunpack.c.l.b16 %v41
  %v120 = vunpack.c.l.b16 %v42
  %v121 = vunpack.c.l.b16 %v43
  %v122 = vunpack.c.l.b16 %v44
  %v123 = vunpack.c.l.b16 %v45
  %v124 = vunpack.c.l.b16 %v46
  %v125 = vunpack.c.l.b16 %v47
  %v126 = vunpack.c.l.b16 %v48
  %v127 = vunpack.c.l.b16 %v49
  %v128 = vunpack.c.l.b16 %v50
  %v129 = vunpack.c.l.b16 %v51
  %v130 = vunpack.c.l.b16 %v52
  %v131 = vunpack.c.l.b16 %v53
  %v132 = vunpack.c.l.b16 %v54
  %v133 = vunpack.c.l.b16 %v55
  %v134 = vunpack.c.l.b16 %v56
  %v135 = vunpack.c.l.b16 %v57
  %v136 = vunpack.c.l.b16 %v58
  %v137 = vunpack.c.l.b16 %v59
  %v138 = vpack.c.b16 %v107, %v106
  %v139 = vpack.c.b16 %v109, %v108
  %v140 = vpack.c.b16 %v111, %v110
  %v141 = vpack.c.b16 %v113, %v112
  %v142 = vpack.c.b16 %v115, %v114
  %v143 = vpack.c.b16 %v117, %v116
  %v144 = vpack.c.b16 %v119, %v118
  %v145 = vpack.c.b16 %v121, %v120
  %v146 = vpack.c.b16 %v123, %v122
  %v147 = vpack.c.b16 %v125, %v124
  %v148 = vpack.c.b16 %v127, %v126
  %v149 = vpack.c.b16 %v129, %v128
  %v150 = vpack.c.b16 %v131, %v130
  %v151 = vpack.c.b16 %v133, %v132
  %v152 = vpack.c.b16 %v135, %v134
  %v153 = vpack.c.b16 %v137, %v136
  %170 = vmatprep.subr.bf16.mxu0 0
  %171 = vmatpush1.bf16.msra.mxu0 %v138
  %172 = vmatprep.subr.bf16.mxu0 0
  %173 = vmatpush1.bf16.msra.mxu0 %v139
  %174 = vmatprep.subr.bf16.mxu0 0
  %175 = vmatpush1.bf16.msra.mxu0 %v140
  %176 = vmatprep.subr.bf16.mxu0 0
  %177 = vmatpush1.bf16.msra.mxu0 %v141
  %178 = vmatprep.subr.bf16.mxu0 0
  %179 = vmatpush1.bf16.msra.mxu0 %v142
  %180 = vmatprep.subr.bf16.mxu0 0
  %181 = vmatpush1.bf16.msra.mxu0 %v143
  %182 = vmatprep.subr.bf16.mxu0 0
  %183 = vmatpush1.bf16.msra.mxu0 %v144
  %184 = vmatprep.subr.bf16.mxu0 0
  %185 = vmatpush1.bf16.msra.mxu0 %v145
  %186 = vmatprep.subr.bf16.mxu0 0
  %187 = vmatpush1.bf16.msra.mxu0 %v146
  %188 = vmatprep.subr.bf16.mxu0 0
  %189 = vmatpush1.bf16.msra.mxu0 %v147
  %190 = vmatprep.subr.bf16.mxu0 0
  %191 = vmatpush1.bf16.msra.mxu0 %v148
  %192 = vmatprep.subr.bf16.mxu0 0
  %193 = vmatpush1.bf16.msra.mxu0 %v149
  %194 = vmatprep.subr.bf16.mxu0 0
  %195 = vmatpush1.bf16.msra.mxu0 %v150
  %196 = vmatprep.subr.bf16.mxu0 0
  %197 = vmatpush1.bf16.msra.mxu0 %v151
  %198 = vmatprep.subr.bf16.mxu0 0
  %199 = vmatpush1.bf16.msra.mxu0 %v152
  %200 = vmatprep.subr.bf16.mxu0 0
  %201 = vmatpush1.bf16.msra.mxu0 %v153
  %202 = vmatprep.mubr.bf16.mxu0 %v71
  %203 = vmatmul.mubr.bf16.gmra.mrb[0].mxu0 %v70
  %v204 = vpop.f32.mrb[0].mxu0
  %v205 = vadd.f32 %v65, %v204
  %v206 = vpop.f32.mrb[0].mxu0
  %v207 = vpop.f32.mrb[0].mxu0
  %v208 = vpop.f32.mrb[0].mxu0
  %209 = vdwg.mxu0
  %v210 = vmax.f32 %v205, 0.0
  %v211 = vpack.c.bf16 %v210, %v210
  %v212 = vld [vmem:[%s3] sm:$0xf]
  %v213 = vld [vmem:[%s3 + $0x4] sm:$0xf]
  %v214 = vld [vmem:[%s4] sm:$0x1]
  %v216 = vlaneseq
  %v217 = vshrl.u32 %v216, 7
  %v218 = vsub.s32 0, %v217
  %v219 = vrot.slane %v214, %v218
  %v223 = vunpack.c.l.b16 %v212
  %v224 = vunpack.c.l.b16 %v213
  %v225 = vpack.c.b16 %v224, %v223
  %vm227 = vcmask 130048
  %v229 = vsel %vm227, %v211, 0
  %231 = vmatprep.subr.bf16.mxu0 0
  %232 = vmatpush1.bf16.msra.mxu0 %v225
  %233 = vmatprep.subr.bf16.mxu0 0
  %234 = vmatpush1.bf16.msra.mxu0 0
  %235 = vmatprep.subr.bf16.mxu0 0
  %236 = vmatpush1.bf16.msra.mxu0 0
  %237 = vmatprep.subr.bf16.mxu0 0
  %238 = vmatpush1.bf16.msra.mxu0 0
  %239 = vmatprep.subr.bf16.mxu0 0
  %240 = vmatpush1.bf16.msra.mxu0 0
  %241 = vmatprep.subr.bf16.mxu0 0
  %242 = vmatpush1.bf16.msra.mxu0 0
  %243 = vmatprep.subr.bf16.mxu0 0
  %244 = vmatpush1.bf16.msra.mxu0 0
  %245 = vmatprep.subr.bf16.mxu0 0
  %246 = vmatpush1.bf16.msra.mxu0 0
  %247 = vmatprep.subr.bf16.mxu0 0
  %248 = vmatpush1.bf16.msra.mxu0 0
  %249 = vmatprep.subr.bf16.mxu0 0
  %250 = vmatpush1.bf16.msra.mxu0 0
  %251 = vmatprep.subr.bf16.mxu0 0
  %252 = vmatpush1.bf16.msra.mxu0 0
  %253 = vmatprep.subr.bf16.mxu0 0
  %254 = vmatpush1.bf16.msra.mxu0 0
  %255 = vmatprep.subr.bf16.mxu0 0
  %256 = vmatpush1.bf16.msra.mxu0 0
  %257 = vmatprep.subr.bf16.mxu0 0
  %258 = vmatpush1.bf16.msra.mxu0 0
  %259 = vmatprep.subr.bf16.mxu0 0
  %260 = vmatpush1.bf16.msra.mxu0 0
  %261 = vmatprep.subr.bf16.mxu0 0
  %262 = vmatpush1.bf16.msra.mxu0 0
  %263 = vmatprep.mubr.bf16.mxu0 0
  %264 = vmatmul.mubr.bf16.gmra.mrb[0].mxu0 %v229
  %v265 = vpop.f32.mrb[0].mxu0
  %v266 = vadd.f32 %v219, %v265
  %v267 = vpop.f32.mrb[0].mxu0
  %v268 = vpop.f32.mrb[0].mxu0
  %v269 = vpop.f32.mrb[0].mxu0
  %270 = vdwg.mxu0
  %v271 = vmax.f32 %v266, 0.0
  %v272 = vpack.c.bf16 %v271, %v271
  %v273 = vld [vmem:[%s5] sm:$0xf]
  %v274 = vld [vmem:[%s5 + $0x4] sm:$0xf]
  %v275 = vld [vmem:[%s5 + $0x8] sm:$0xf]
  %v276 = vld [vmem:[%s5 + $0xc] sm:$0xf]
  %v277 = vld [vmem:[%s6] sm:$0x1]
  %v279 = vlaneseq
  %v280 = vshrl.u32 %v279, 7
  %v281 = vsub.s32 0, %v280
  %v282 = vrot.slane %v277, %v281
  %v288 = vunpack.c.l.b16 %v273
  %v289 = vunpack.c.l.b16 %v274
  %v290 = vunpack.c.l.b16 %v275
  %v291 = vunpack.c.l.b16 %v276
  %v292 = vpack.c.b16 %v289, %v288
  %v293 = vpack.c.b16 %v291, %v290
  %vm296 = vcmask 261120
  %v298 = vsel %vm296, %v272, 0
  %300 = vmatprep.subr.bf16.mxu0 0
  %301 = vmatpush1.bf16.msra.mxu0 %v292
  %302 = vmatprep.subr.bf16.mxu0 0
  %303 = vmatpush1.bf16.msra.mxu0 %v293
  %304 = vmatprep.subr.bf16.mxu0 0
  %305 = vmatpush1.bf16.msra.mxu0 0
  %306 = vmatprep.subr.bf16.mxu0 0
  %307 = vmatpush1.bf16.msra.mxu0 0
  %308 = vmatprep.subr.bf16.mxu0 0
  %309 = vmatpush1.bf16.msra.mxu0 0
  %310 = vmatprep.subr.bf16.mxu0 0
  %311 = vmatpush1.bf16.msra.mxu0 0
  %312 = vmatprep.subr.bf16.mxu0 0
  %313 = vmatpush1.bf16.msra.mxu0 0
  %314 = vmatprep.subr.bf16.mxu0 0
  %315 = vmatpush1.bf16.msra.mxu0 0
  %316 = vmatprep.subr.bf16.mxu0 0
  %317 = vmatpush1.bf16.msra.mxu0 0
  %318 = vmatprep.subr.bf16.mxu0 0
  %319 = vmatpush1.bf16.msra.mxu0 0
  %320 = vmatprep.subr.bf16.mxu0 0
  %321 = vmatpush1.bf16.msra.mxu0 0
  %322 = vmatprep.subr.bf16.mxu0 0
  %323 = vmatpush1.bf16.msra.mxu0 0
  %324 = vmatprep.subr.bf16.mxu0 0
  %325 = vmatpush1.bf16.msra.mxu0 0
  %326 = vmatprep.subr.bf16.mxu0 0
  %327 = vmatpush1.bf16.msra.mxu0 0
  %328 = vmatprep.subr.bf16.mxu0 0
  %329 = vmatpush1.bf16.msra.mxu0 0
  %330 = vmatprep.subr.bf16.mxu0 0
  %331 = vmatpush1.bf16.msra.mxu0 0
  %332 = vmatprep.mubr.bf16.mxu0 0
  %333 = vmatmul.mubr.bf16.gmra.mrb[0].mxu0 %v298
  %v334 = vpop.f32.mrb[0].mxu0
  %v335 = vadd.f32 %v282, %v334
  %v336 = vpop.f32.mrb[0].mxu0
  %v337 = vpop.f32.mrb[0].mxu0
  %v338 = vpop.f32.mrb[0].mxu0
  %339 = vdwg.mxu0
  %340 = vst [vmem:[%s7] sm:$0xff] %v335
  // Predicated region
  $region30: #{ffn_mnist_forward.1} parent=0 // pred_check
    _
  $region31: #{ffn_mnist_forward.1} parent=0 // pred_check_branch
    %342 = sbr.rel (0) target = $region33
  $region32: #{ffn_mnist_forward.1} parent=0 // pred_region
    _
  $region33: #{ffn_mnist_forward.1} parent=0 // pred_fallthru
    _
  // Predicated region
  $region34: #{ffn_mnist_forward.1} parent=0 // pred_check
    _
  $region35: #{ffn_mnist_forward.1} parent=0 // pred_check_branch
    %344 = sbr.rel (0) target = $region37
  $region36: #{ffn_mnist_forward.1} parent=0 // pred_region
    _
  $region37: #{ffn_mnist_forward.1} parent=0 // pred_fallthru
    _

</llo_original>
